<compile_context>
chip_gen: v7x
topology: tpu7x:2x2x1
jax: 0.10.0
libtpu: 0.0.40
codegen_flags: <defaults>
</compile_context>

<pallas_src>
import functools

import jax
import jax.numpy as jnp
from jax.experimental import pallas as pl
from jax.experimental.pallas import tpu as pltpu

D_IN = 512
D_H1 = 512
D_H2 = 256
C_PAD = 128          # lane-dense padded logit width
TM_MAX = 512         # batch tile (rows per grid step), multiple of 8


def _round_up(n, m):
    return ((n + m - 1) // m) * m


def gender_branch_kernel(x_ref, w1_ref, w2_ref, w3_ref, o_ref):
    # x_ref:  (TM, 512)   bf16
    # w1_ref: (512, 512)  bf16  glinear1.weight.T
    # w2_ref: (512, 256)  bf16  glinear2.weight.T
    # w3_ref: (256, 128)  bf16  glinear3.weight.T zero-padded to 128 lanes
    # o_ref:  (TM, 128)   f32
    x = x_ref[...]

    # Linear1 -> dropout(identity, eval) -> ReLU (on f32 acc), cast bf16.
    # TODO(synk): training-mode dropout (Bernoulli mask via pltpu.prng_*) not
    # implemented; inference semantics (identity) are reproduced exactly.
    h1 = jnp.dot(x, w1_ref[...], preferred_element_type=jnp.float32)
    h1 = jnp.maximum(h1, 0.0).astype(jnp.bfloat16)

    # Linear2 -> dropout(identity, eval) -> ReLU (on f32 acc), cast bf16.
    h2 = jnp.dot(h1, w2_ref[...], preferred_element_type=jnp.float32)
    h2 = jnp.maximum(h2, 0.0).astype(jnp.bfloat16)

    # Linear3 (logits, no activation). Padded lanes hit zero columns.
    o_ref[...] = jnp.dot(h2, w3_ref[...],
                         preferred_element_type=jnp.float32).astype(o_ref.dtype)


@functools.partial(jax.jit, static_argnames=("num_classes",))
def gender_branch(x, w1_t, w2_t, w3_t, *, num_classes):
    """x: (B, 512); w*_t are (in, out) transposed Linear weights (any float dtype).

    Returns (B, num_classes) float32 logits.
    """
    B = x.shape[0]
    assert x.shape[1] == D_IN
    assert 0 < num_classes <= C_PAD

    # --- bf16 weights / activations (f32 accumulation inside the kernel) ---
    xb = x.astype(jnp.bfloat16)
    w1b = w1_t.astype(jnp.bfloat16)
    w2b = w2_t.astype(jnp.bfloat16)
    # Zero-pad classifier columns to a lane-dense 128-wide output.
    w3b = jnp.pad(w3_t.astype(jnp.bfloat16),
                  ((0, 0), (0, C_PAD - num_classes)))

    # --- batch tiling: pad B to a multiple of the tile TM (TM multiple of 8) ---
    b8 = _round_up(B, 8)
    tm = min(TM_MAX, b8)
    b_pad = _round_up(b8, tm)
    if b_pad != B:
        xb = jnp.pad(xb, ((0, b_pad - B), (0, 0)))
    grid = (b_pad // tm,)

    flops = 2 * b_pad * (D_IN * D_H1 + D_H1 * D_H2 + D_H2 * C_PAD)
    bytes_accessed = (
        2 * (w1b.size + w2b.size + w3b.size)   # bf16 weights (loaded once)
        + 2 * xb.size                          # bf16 activations in
        + 4 * b_pad * C_PAD                    # f32 logits out
    )

    out = pl.pallas_call(
        gender_branch_kernel,
        out_shape=jax.ShapeDtypeStruct((b_pad, C_PAD), jnp.float32),
        grid=grid,
        in_specs=[
            # x tiles stream per grid step (double-buffered by Pallas).
            pl.BlockSpec((tm, D_IN), lambda i: (i, 0)),
            # Weights: same block every step -> loaded once, stay resident.
            pl.BlockSpec((D_IN, D_H1), lambda i: (0, 0)),
            pl.BlockSpec((D_H1, D_H2), lambda i: (0, 0)),
            pl.BlockSpec((D_H2, C_PAD), lambda i: (0, 0)),
        ],
        out_specs=pl.BlockSpec((tm, C_PAD), lambda i: (i, 0)),
        compiler_params=pltpu.CompilerParams(
            dimension_semantics=("parallel",)),  # megacore-shard batch
        cost_estimate=pl.CostEstimate(
            flops=flops, transcendentals=0, bytes_accessed=bytes_accessed),
    )(xb, w1b, w2b, w3b)

    return out[:B, :num_classes]


def init_params(key, num_classes=3):
    """Deterministic synthetic parameters with nn.Linear shapes:
       glinear1: (512,512), glinear2: (256,512), glinear3: (C,256) — stored
       transposed as (in, out) for the kernel."""
    k1, k2, k3 = jax.random.split(key, 3)
    # Kaiming-uniform-ish scale: U(-1/sqrt(fan_in), 1/sqrt(fan_in))
    w1 = jax.random.uniform(k1, (D_H1, D_IN), jnp.float32, -1.0, 1.0) / jnp.sqrt(512.0)
    w2 = jax.random.uniform(k2, (D_H2, D_H1), jnp.float32, -1.0, 1.0) / jnp.sqrt(512.0)
    w3 = jax.random.uniform(k3, (num_classes, D_H2), jnp.float32, -1.0, 1.0) / jnp.sqrt(256.0)
    # transpose to (in, out)
    return w1.T, w2.T, w3.T


def reference_f32(x, w1_t, w2_t, w3_t):
    h1 = jnp.maximum(x @ w1_t, 0.0)
    h2 = jnp.maximum(h1 @ w2_t, 0.0)
    return h2 @ w3_t


if __name__ == "__main__":
    key = jax.random.PRNGKey(0)
    kx, kp = jax.random.split(key)

    B, NUM_CLASSES = 2, 3
    x = jax.random.normal(kx, (B, D_IN), dtype=jnp.float32)
    w1_t, w2_t, w3_t = init_params(kp, NUM_CLASSES)

    out = gender_branch(x, w1_t, w2_t, w3_t, num_classes=NUM_CLASSES)
    out = jax.block_until_ready(out)

    ref = reference_f32(x, w1_t, w2_t, w3_t)
    assert out.shape == (B, NUM_CLASSES), out.shape
    # bf16 weights/activations with f32 accumulation: ~1e-2-level relative error.
    assert jnp.allclose(out, ref, atol=5e-2, rtol=5e-2), (
        "mismatch vs reference: max abs err = "
        f"{float(jnp.max(jnp.abs(out - ref)))}")

    # Also exercise a batch large enough to hit multiple grid steps + padding.
    xb_big = jax.random.normal(kx, (1200, D_IN), dtype=jnp.float32)
    out_big = jax.block_until_ready(
        gender_branch(xb_big, w1_t, w2_t, w3_t, num_classes=NUM_CLASSES))
    ref_big = reference_f32(xb_big, w1_t, w2_t, w3_t)
    assert out_big.shape == (1200, NUM_CLASSES)
    assert jnp.allclose(out_big, ref_big, atol=5e-2, rtol=5e-2), "big-batch mismatch"

    print("KERNEL_OK")
</pallas_src>

<mosaic_0001>
module attributes {stable_mosaic.version = 11 : i64} {
  func.func @gender_branch_kernel(%arg0: i32, %arg1: memref<8x512xbf16, #tpu.memory_space<vmem>>, %arg2: memref<512x512xbf16, #tpu.memory_space<vmem>>, %arg3: memref<512x256xbf16, #tpu.memory_space<vmem>>, %arg4: memref<256x128xbf16, #tpu.memory_space<vmem>>, %arg5: memref<8x128xf32, #tpu.memory_space<vmem>>) attributes {dimension_semantics = [#tpu.dimension_semantics<parallel>], iteration_bounds = array<i64: 1>, scalar_prefetch = 0 : i64, scratch_operands = 0 : i64, tpu.core_type = #tpu.core_type<tc>, window_params = [{transform_indices = @transform_0, window_bounds = array<i64: 8, 512>}, {pipeline_mode = #tpu.pipeline_mode<synchronous>, transform_indices = @transform_1, window_bounds = array<i64: 512, 512>}, {pipeline_mode = #tpu.pipeline_mode<synchronous>, transform_indices = @transform_2, window_bounds = array<i64: 512, 256>}, {pipeline_mode = #tpu.pipeline_mode<synchronous>, transform_indices = @transform_3, window_bounds = array<i64: 256, 128>}, {transform_indices = @transform_4, window_bounds = array<i64: 8, 128>}]} {
    %c0 = arith.constant 0 : index
    %c0_0 = arith.constant 0 : index
    %0 = vector.load %arg1[%c0, %c0_0] : memref<8x512xbf16, #tpu.memory_space<vmem>>, vector<8x512xbf16>
    %c0_1 = arith.constant 0 : index
    %c0_2 = arith.constant 0 : index
    %1 = vector.load %arg2[%c0_1, %c0_2] : memref<512x512xbf16, #tpu.memory_space<vmem>>, vector<512x512xbf16>
    %cst = arith.constant dense<0.000000e+00> : vector<8x512xf32>
    %2 = tpu.matmul %0, %1, %cst {dimension_numbers = #tpu.dot_dimension_numbers<[1], [0], [0], [1], [0, 0, 1, 1], [], []>} : vector<8x512xbf16>, vector<512x512xbf16>, vector<8x512xf32> -> vector<8x512xf32>
    %cst_3 = arith.constant 0.000000e+00 : f32
    %3 = vector.broadcast %cst_3 : f32 to vector<8x512xf32>
    %4 = arith.maximumf %2, %3 : vector<8x512xf32>
    %5 = arith.truncf %4 : vector<8x512xf32> to vector<8x512xbf16>
    %c0_4 = arith.constant 0 : index
    %c0_5 = arith.constant 0 : index
    %6 = vector.load %arg3[%c0_4, %c0_5] : memref<512x256xbf16, #tpu.memory_space<vmem>>, vector<512x256xbf16>
    %cst_6 = arith.constant dense<0.000000e+00> : vector<8x256xf32>
    %7 = tpu.matmul %5, %6, %cst_6 {dimension_numbers = #tpu.dot_dimension_numbers<[1], [0], [0], [1], [0, 0, 1, 1], [], []>} : vector<8x512xbf16>, vector<512x256xbf16>, vector<8x256xf32> -> vector<8x256xf32>
    %cst_7 = arith.constant 0.000000e+00 : f32
    %8 = vector.broadcast %cst_7 : f32 to vector<8x256xf32>
    %9 = arith.maximumf %7, %8 : vector<8x256xf32>
    %10 = arith.truncf %9 : vector<8x256xf32> to vector<8x256xbf16>
    %c0_8 = arith.constant 0 : index
    %c0_9 = arith.constant 0 : index
    %11 = vector.load %arg4[%c0_8, %c0_9] : memref<256x128xbf16, #tpu.memory_space<vmem>>, vector<256x128xbf16>
    %cst_10 = arith.constant dense<0.000000e+00> : vector<8x128xf32>
    %12 = tpu.matmul %10, %11, %cst_10 {dimension_numbers = #tpu.dot_dimension_numbers<[1], [0], [0], [1], [0, 0, 1, 1], [], []>} : vector<8x256xbf16>, vector<256x128xbf16>, vector<8x128xf32> -> vector<8x128xf32>
    %c0_11 = arith.constant 0 : index
    %c0_12 = arith.constant 0 : index
    %13 = vector.load %arg5[%c0_11, %c0_12] : memref<8x128xf32, #tpu.memory_space<vmem>>, vector<8x128xf32>
    tpu.vector_store %arg5[%c0_11, %c0_12], %12 {strides = array<i32>} : memref<8x128xf32, #tpu.memory_space<vmem>>, vector<8x128xf32>,
    return
  }
  func.func @transform_0(%arg0: i32) -> (i32, i32) {
    %c0_i32 = arith.constant 0 : i32
    %c0_i32_0 = arith.constant 0 : i32
    return %arg0, %c0_i32 : i32, i32
  }
  func.func @transform_1(%arg0: i32) -> (i32, i32) {
    %c0_i32 = arith.constant 0 : i32
    %c0_i32_0 = arith.constant 0 : i32
    %c0_i32_1 = arith.constant 0 : i32
    return %c0_i32, %c0_i32_0 : i32, i32
  }
  func.func @transform_2(%arg0: i32) -> (i32, i32) {
    %c0_i32 = arith.constant 0 : i32
    %c0_i32_0 = arith.constant 0 : i32
    %c0_i32_1 = arith.constant 0 : i32
    return %c0_i32, %c0_i32_0 : i32, i32
  }
  func.func @transform_3(%arg0: i32) -> (i32, i32) {
    %c0_i32 = arith.constant 0 : i32
    %c0_i32_0 = arith.constant 0 : i32
    %c0_i32_1 = arith.constant 0 : i32
    return %c0_i32, %c0_i32_0 : i32, i32
  }
  func.func @transform_4(%arg0: i32) -> (i32, i32) {
    %c0_i32 = arith.constant 0 : i32
    %c0_i32_0 = arith.constant 0 : i32
    return %arg0, %c0_i32 : i32, i32
  }
}

</mosaic_0001>

<llo_original>
// kernel: gender_branch.1
$region0: #{gender_branch.1}
  #allocation0 [shape = 'u32[]', space=smem, size = 0x4, offset = 0x4, fixed_abs, tag = 'smem constant byte address 0x4 - core index']
  #allocation1 [shape = 'u32[144,128]{1,0:T(1,128)}', space=vmem, size = 0x12000, scoped, tag = 'internal scratch']
  %s0 = inlined_call_operand.vmem [shape: bf16[8,512], index: 0, kind: input, shape index: {}]
  %s1 = inlined_call_operand.vmem [shape: bf16[512,512], index: 1, kind: input, shape index: {}]
  %s2 = inlined_call_operand.vmem [shape: bf16[512,256], index: 2, kind: input, shape index: {}]
  %s3 = inlined_call_operand.vmem [shape: bf16[256,128], index: 3, kind: input, shape index: {}]
  %s4 = inlined_call_operand.vmem [shape: f32[8,128], index: 4, kind: output, shape index: {}]
  %s5 = sld [smem:[#allocation0]]
  $region26: #{gender_branch.1} parent=0
    _
  %s7 = ssub.s32 1, %s5
  %s8 = scalar_select 0, %s7, %s5
  // Predicated region
  $region2: #{gender_branch.1} parent=0 // pred_check
    _
  $region3: #{gender_branch.1} parent=0 // pred_check_branch
    %10 = sbr.rel (0) target = $region5
  $region4: #{gender_branch.1} parent=0 // pred_region
    _
  $region5: #{gender_branch.1} parent=0 // pred_fallthru
    _
  // Predicated region
  $region6: #{gender_branch.1} parent=0 // pred_check
    _
  $region7: #{gender_branch.1} parent=0 // pred_check_branch
    %12 = sbr.rel (0) target = $region9
  $region8: #{gender_branch.1} parent=0 // pred_region
    _
  $region9: #{gender_branch.1} parent=0 // pred_fallthru
    _
  // Predicated region
  $region10: #{gender_branch.1} parent=0 // pred_check
    _
  $region11: #{gender_branch.1} parent=0 // pred_check_branch
    %14 = sbr.rel (0) target = $region13
  $region12: #{gender_branch.1} parent=0 // pred_region
    _
  $region13: #{gender_branch.1} parent=0 // pred_fallthru
    _
  // Predicated region
  $region14: #{gender_branch.1} parent=0 // pred_check
    _
  $region15: #{gender_branch.1} parent=0 // pred_check_branch
    %16 = sbr.rel (0) target = $region17
  $region16: #{gender_branch.1} parent=0 // pred_region
    _
  $region17: #{gender_branch.1} parent=0 // pred_fallthru
    _
  %v18 = vld [vmem:[%s0] sm:$0xff]
  %v19 = vld [vmem:[%s0 + $0x8] sm:$0xff]
  %v20 = vld [vmem:[%s1] sm:$0xff]
  %v21 = vld [vmem:[%s1 + $0x8] sm:$0xff]
  %v22 = vld [vmem:[%s1 + $0x10] sm:$0xff]
  %v23 = vld [vmem:[%s1 + $0x18] sm:$0xff]
  %v24 = vld [vmem:[%s1 + $0x20] sm:$0xff]
  %v25 = vld [vmem:[%s1 + $0x28] sm:$0xff]
  %v26 = vld [vmem:[%s1 + $0x30] sm:$0xff]
  %v27 = vld [vmem:[%s1 + $0x38] sm:$0xff]
  %v28 = vld [vmem:[%s1 + $0x40] sm:$0xff]
  %v29 = vld [vmem:[%s1 + $0x48] sm:$0xff]
  %v30 = vld [vmem:[%s1 + $0x50] sm:$0xff]
  %v31 = vld [vmem:[%s1 + $0x58] sm:$0xff]
  %v32 = vld [vmem:[%s1 + $0x60] sm:$0xff]
  %v33 = vld [vmem:[%s1 + $0x68] sm:$0xff]
  %v34 = vld [vmem:[%s1 + $0x70] sm:$0xff]
  %v35 = vld [vmem:[%s1 + $0x78] sm:$0xff]
  %v36 = vld [vmem:[%s1 + $0x80] sm:$0xff]
  %v37 = vld [vmem:[%s1 + $0x88] sm:$0xff]
  %v38 = vld [vmem:[%s1 + $0x90] sm:$0xff]
  %v39 = vld [vmem:[%s1 + $0x98] sm:$0xff]
  %v40 = vld [vmem:[%s1 + $0xa0] sm:$0xff]
  %v41 = vld [vmem:[%s1 + $0xa8] sm:$0xff]
  %v42 = vld [vmem:[%s1 + $0xb0] sm:$0xff]
  %v43 = vld [vmem:[%s1 + $0xb8] sm:$0xff]
  %v44 = vld [vmem:[%s1 + $0xc0] sm:$0xff]
  %v45 = vld [vmem:[%s1 + $0xc8] sm:$0xff]
  %v46 = vld [vmem:[%s1 + $0xd0] sm:$0xff]
  %v47 = vld [vmem:[%s1 + $0xd8] sm:$0xff]
  %v48 = vld [vmem:[%s1 + $0xe0] sm:$0xff]
  %v49 = vld [vmem:[%s1 + $0xe8] sm:$0xff]
  %v50 = vld [vmem:[%s1 + $0xf0] sm:$0xff]
  %v51 = vld [vmem:[%s1 + $0xf8] sm:$0xff]
  %v52 = vld [vmem:[%s1 + $0x100] sm:$0xff]
  %v53 = vld [vmem:[%s1 + $0x108] sm:$0xff]
  %v54 = vld [vmem:[%s1 + $0x110] sm:$0xff]
  %v55 = vld [vmem:[%s1 + $0x118] sm:$0xff]
  %v56 = vld [vmem:[%s1 + $0x120] sm:$0xff]
  %v57 = vld [vmem:[%s1 + $0x128] sm:$0xff]
  %v58 = vld [vmem:[%s1 + $0x130] sm:$0xff]
  %v59 = vld [vmem:[%s1 + $0x138] sm:$0xff]
  %v60 = vld [vmem:[%s1 + $0x140] sm:$0xff]
  %v61 = vld [vmem:[%s1 + $0x148] sm:$0xff]
  %v62 = vld [vmem:[%s1 + $0x150] sm:$0xff]
  %v63 = vld [vmem:[%s1 + $0x158] sm:$0xff]
  %v64 = vld [vmem:[%s1 + $0x160] sm:$0xff]
  %v65 = vld [vmem:[%s1 + $0x168] sm:$0xff]
  %v66 = vld [vmem:[%s1 + $0x170] sm:$0xff]
  %v67 = vld [vmem:[%s1 + $0x178] sm:$0xff]
  %v68 = vld [vmem:[%s1 + $0x180] sm:$0xff]
  %v69 = vld [vmem:[%s1 + $0x188] sm:$0xff]
  %v70 = vld [vmem:[%s1 + $0x190] sm:$0xff]
  %v71 = vld [vmem:[%s1 + $0x198] sm:$0xff]
  %v72 = vld [vmem:[%s1 + $0x1a0] sm:$0xff]
  %v73 = vld [vmem:[%s1 + $0x1a8] sm:$0xff]
  %v74 = vld [vmem:[%s1 + $0x1b0] sm:$0xff]
  %v75 = vld [vmem:[%s1 + $0x1b8] sm:$0xff]
  %v76 = vld [vmem:[%s1 + $0x1c0] sm:$0xff]
  %v77 = vld [vmem:[%s1 + $0x1c8] sm:$0xff]
  %v78 = vld [vmem:[%s1 + $0x1d0] sm:$0xff]
  %v79 = vld [vmem:[%s1 + $0x1d8] sm:$0xff]
  %v80 = vld [vmem:[%s1 + $0x1e0] sm:$0xff]
  %v81 = vld [vmem:[%s1 + $0x1e8] sm:$0xff]
  %v82 = vld [vmem:[%s1 + $0x1f0] sm:$0xff]
  %v83 = vld [vmem:[%s1 + $0x1f8] sm:$0xff]
  %v84 = vld [vmem:[%s1 + $0x200] sm:$0xff]
  %v85 = vld [vmem:[%s1 + $0x208] sm:$0xff]
  %v86 = vld [vmem:[%s1 + $0x210] sm:$0xff]
  %v87 = vld [vmem:[%s1 + $0x218] sm:$0xff]
  %v88 = vld [vmem:[%s1 + $0x220] sm:$0xff]
  %v89 = vld [vmem:[%s1 + $0x228] sm:$0xff]
  %v90 = vld [vmem:[%s1 + $0x230] sm:$0xff]
  %v91 = vld [vmem:[%s1 + $0x238] sm:$0xff]
  %v92 = vld [vmem:[%s1 + $0x240] sm:$0xff]
  %v93 = vld [vmem:[%s1 + $0x248] sm:$0xff]
  %v94 = vld [vmem:[%s1 + $0x250] sm:$0xff]
  %v95 = vld [vmem:[%s1 + $0x258] sm:$0xff]
  %v96 = vld [vmem:[%s1 + $0x260] sm:$0xff]
  %v97 = vld [vmem:[%s1 + $0x268] sm:$0xff]
  %v98 = vld [vmem:[%s1 + $0x270] sm:$0xff]
  %v99 = vld [vmem:[%s1 + $0x278] sm:$0xff]
  %v100 = vld [vmem:[%s1 + $0x280] sm:$0xff]
  %v101 = vld [vmem:[%s1 + $0x288] sm:$0xff]
  %v102 = vld [vmem:[%s1 + $0x290] sm:$0xff]
  %v103 = vld [vmem:[%s1 + $0x298] sm:$0xff]
  %v104 = vld [vmem:[%s1 + $0x2a0] sm:$0xff]
  %v105 = vld [vmem:[%s1 + $0x2a8] sm:$0xff]
  %v106 = vld [vmem:[%s1 + $0x2b0] sm:$0xff]
  %v107 = vld [vmem:[%s1 + $0x2b8] sm:$0xff]
  %v108 = vld [vmem:[%s1 + $0x2c0] sm:$0xff]
  %v109 = vld [vmem:[%s1 + $0x2c8] sm:$0xff]
  %v110 = vld [vmem:[%s1 + $0x2d0] sm:$0xff]
  %v111 = vld [vmem:[%s1 + $0x2d8] sm:$0xff]
  %v112 = vld [vmem:[%s1 + $0x2e0] sm:$0xff]
  %v113 = vld [vmem:[%s1 + $0x2e8] sm:$0xff]
  %v114 = vld [vmem:[%s1 + $0x2f0] sm:$0xff]
  %v115 = vld [vmem:[%s1 + $0x2f8] sm:$0xff]
  %v116 = vld [vmem:[%s1 + $0x300] sm:$0xff]
  %v117 = vld [vmem:[%s1 + $0x308] sm:$0xff]
  %v118 = vld [vmem:[%s1 + $0x310] sm:$0xff]
  %v119 = vld [vmem:[%s1 + $0x318] sm:$0xff]
  %v120 = vld [vmem:[%s1 + $0x320] sm:$0xff]
  %v121 = vld [vmem:[%s1 + $0x328] sm:$0xff]
  %v122 = vld [vmem:[%s1 + $0x330] sm:$0xff]
  %v123 = vld [vmem:[%s1 + $0x338] sm:$0xff]
  %v124 = vld [vmem:[%s1 + $0x340] sm:$0xff]
  %v125 = vld [vmem:[%s1 + $0x348] sm:$0xff]
  %v126 = vld [vmem:[%s1 + $0x350] sm:$0xff]
  %v127 = vld [vmem:[%s1 + $0x358] sm:$0xff]
  %v128 = vld [vmem:[%s1 + $0x360] sm:$0xff]
  %v129 = vld [vmem:[%s1 + $0x368] sm:$0xff]
  %v130 = vld [vmem:[%s1 + $0x370] sm:$0xff]
  %v131 = vld [vmem:[%s1 + $0x378] sm:$0xff]
  %v132 = vld [vmem:[%s1 + $0x380] sm:$0xff]
  %v133 = vld [vmem:[%s1 + $0x388] sm:$0xff]
  %v134 = vld [vmem:[%s1 + $0x390] sm:$0xff]
  %v135 = vld [vmem:[%s1 + $0x398] sm:$0xff]
  %v136 = vld [vmem:[%s1 + $0x3a0] sm:$0xff]
  %v137 = vld [vmem:[%s1 + $0x3a8] sm:$0xff]
  %v138 = vld [vmem:[%s1 + $0x3b0] sm:$0xff]
  %v139 = vld [vmem:[%s1 + $0x3b8] sm:$0xff]
  %v140 = vld [vmem:[%s1 + $0x3c0] sm:$0xff]
  %v141 = vld [vmem:[%s1 + $0x3c8] sm:$0xff]
  %v142 = vld [vmem:[%s1 + $0x3d0] sm:$0xff]
  %v143 = vld [vmem:[%s1 + $0x3d8] sm:$0xff]
  %v144 = vld [vmem:[%s1 + $0x3e0] sm:$0xff]
  %v145 = vld [vmem:[%s1 + $0x3e8] sm:$0xff]
  %v146 = vld [vmem:[%s1 + $0x3f0] sm:$0xff]
  %v147 = vld [vmem:[%s1 + $0x3f8] sm:$0xff]
  %v150 = vunpack.c.l.b16 %v18
  %v151 = vunpack.c.h.b16 %v18
  %v152 = vunpack.c.l.b16 %v19
  %v153 = vunpack.c.h.b16 %v19
  %v154 = vpack.c.b16 %v150, %v150
  %v155 = vpack.c.b16 %v151, %v151
  %v156 = vpack.c.b16 %v152, %v152
  %v157 = vpack.c.b16 %v153, %v153
  %v290 = vunpack.c.l.b16 %v20
  %v291 = vunpack.c.h.b16 %v20
  %v292 = vunpack.c.l.b16 %v21
  %v293 = vunpack.c.h.b16 %v21
  %v294 = vunpack.c.l.b16 %v22
  %v295 = vunpack.c.h.b16 %v22
  %v296 = vunpack.c.l.b16 %v23
  %v297 = vunpack.c.h.b16 %v23
  %v298 = vunpack.c.l.b16 %v24
  %v299 = vunpack.c.h.b16 %v24
  %v300 = vunpack.c.l.b16 %v25
  %v301 = vunpack.c.h.b16 %v25
  %v302 = vunpack.c.l.b16 %v26
  %v303 = vunpack.c.h.b16 %v26
  %v304 = vunpack.c.l.b16 %v27
  %v305 = vunpack.c.h.b16 %v27
  %v306 = vunpack.c.l.b16 %v28
  %v307 = vunpack.c.h.b16 %v28
  %v308 = vunpack.c.l.b16 %v29
  %v309 = vunpack.c.h.b16 %v29
  %v310 = vunpack.c.l.b16 %v30
  %v311 = vunpack.c.h.b16 %v30
  %v312 = vunpack.c.l.b16 %v31
  %v313 = vunpack.c.h.b16 %v31
  %v314 = vunpack.c.l.b16 %v32
  %v315 = vunpack.c.h.b16 %v32
  %v316 = vunpack.c.l.b16 %v33
  %v317 = vunpack.c.h.b16 %v33
  %v318 = vunpack.c.l.b16 %v34
  %v319 = vunpack.c.h.b16 %v34
  %v320 = vunpack.c.l.b16 %v35
  %v321 = vunpack.c.h.b16 %v35
  %v322 = vunpack.c.l.b16 %v36
  %v323 = vunpack.c.h.b16 %v36
  %v324 = vunpack.c.l.b16 %v37
  %v325 = vunpack.c.h.b16 %v37
  %v326 = vunpack.c.l.b16 %v38
  %v327 = vunpack.c.h.b16 %v38
  %v328 = vunpack.c.l.b16 %v39
  %v329 = vunpack.c.h.b16 %v39
  %v330 = vunpack.c.l.b16 %v40
  %v331 = vunpack.c.h.b16 %v40
  %v332 = vunpack.c.l.b16 %v41
  %v333 = vunpack.c.h.b16 %v41
  %v334 = vunpack.c.l.b16 %v42
  %v335 = vunpack.c.h.b16 %v42
  %v336 = vunpack.c.l.b16 %v43
  %v337 = vunpack.c.h.b16 %v43
  %v338 = vunpack.c.l.b16 %v44
  %v339 = vunpack.c.h.b16 %v44
  %v340 = vunpack.c.l.b16 %v45
  %v341 = vunpack.c.h.b16 %v45
  %v342 = vunpack.c.l.b16 %v46
  %v343 = vunpack.c.h.b16 %v46
  %v344 = vunpack.c.l.b16 %v47
  %v345 = vunpack.c.h.b16 %v47
  %v346 = vunpack.c.l.b16 %v48
  %v347 = vunpack.c.h.b16 %v48
  %v348 = vunpack.c.l.b16 %v49
  %v349 = vunpack.c.h.b16 %v49
  %v350 = vunpack.c.l.b16 %v50
  %v351 = vunpack.c.h.b16 %v50
  %v352 = vunpack.c.l.b16 %v51
  %v353 = vunpack.c.h.b16 %v51
  %v354 = vunpack.c.l.b16 %v52
  %v355 = vunpack.c.h.b16 %v52
  %v356 = vunpack.c.l.b16 %v53
  %v357 = vunpack.c.h.b16 %v53
  %v358 = vunpack.c.l.b16 %v54
  %v359 = vunpack.c.h.b16 %v54
  %v360 = vunpack.c.l.b16 %v55
  %v361 = vunpack.c.h.b16 %v55
  %v362 = vunpack.c.l.b16 %v56
  %v363 = vunpack.c.h.b16 %v56
  %v364 = vunpack.c.l.b16 %v57
  %v365 = vunpack.c.h.b16 %v57
  %v366 = vunpack.c.l.b16 %v58
  %v367 = vunpack.c.h.b16 %v58
  %v368 = vunpack.c.l.b16 %v59
  %v369 = vunpack.c.h.b16 %v59
  %v370 = vunpack.c.l.b16 %v60
  %v371 = vunpack.c.h.b16 %v60
  %v372 = vunpack.c.l.b16 %v61
  %v373 = vunpack.c.h.b16 %v61
  %v374 = vunpack.c.l.b16 %v62
  %v375 = vunpack.c.h.b16 %v62
  %v376 = vunpack.c.l.b16 %v63
  %v377 = vunpack.c.h.b16 %v63
  %v378 = vunpack.c.l.b16 %v64
  %v379 = vunpack.c.h.b16 %v64
  %v380 = vunpack.c.l.b16 %v65
  %v381 = vunpack.c.h.b16 %v65
  %v382 = vunpack.c.l.b16 %v66
  %v383 = vunpack.c.h.b16 %v66
  %v384 = vunpack.c.l.b16 %v67
  %v385 = vunpack.c.h.b16 %v67
  %v386 = vunpack.c.l.b16 %v68
  %v387 = vunpack.c.h.b16 %v68
  %v388 = vunpack.c.l.b16 %v69
  %v389 = vunpack.c.h.b16 %v69
  %v390 = vunpack.c.l.b16 %v70
  %v391 = vunpack.c.h.b16 %v70
  %v392 = vunpack.c.l.b16 %v71
  %v393 = vunpack.c.h.b16 %v71
  %v394 = vunpack.c.l.b16 %v72
  %v395 = vunpack.c.h.b16 %v72
  %v396 = vunpack.c.l.b16 %v73
  %v397 = vunpack.c.h.b16 %v73
  %v398 = vunpack.c.l.b16 %v74
  %v399 = vunpack.c.h.b16 %v74
  %v400 = vunpack.c.l.b16 %v75
  %v401 = vunpack.c.h.b16 %v75
  %v402 = vunpack.c.l.b16 %v76
  %v403 = vunpack.c.h.b16 %v76
  %v404 = vunpack.c.l.b16 %v77
  %v405 = vunpack.c.h.b16 %v77
  %v406 = vunpack.c.l.b16 %v78
  %v407 = vunpack.c.h.b16 %v78
  %v408 = vunpack.c.l.b16 %v79
  %v409 = vunpack.c.h.b16 %v79
  %v410 = vunpack.c.l.b16 %v80
  %v411 = vunpack.c.h.b16 %v80
  %v412 = vunpack.c.l.b16 %v81
  %v413 = vunpack.c.h.b16 %v81
  %v414 = vunpack.c.l.b16 %v82
  %v415 = vunpack.c.h.b16 %v82
  %v416 = vunpack.c.l.b16 %v83
  %v417 = vunpack.c.h.b16 %v83
  %v418 = vunpack.c.l.b16 %v84
  %v419 = vunpack.c.h.b16 %v84
  %v420 = vunpack.c.l.b16 %v85
  %v421 = vunpack.c.h.b16 %v85
  %v422 = vunpack.c.l.b16 %v86
  %v423 = vunpack.c.h.b16 %v86
  %v424 = vunpack.c.l.b16 %v87
  %v425 = vunpack.c.h.b16 %v87
  %v426 = vunpack.c.l.b16 %v88
  %v427 = vunpack.c.h.b16 %v88
  %v428 = vunpack.c.l.b16 %v89
  %v429 = vunpack.c.h.b16 %v89
  %v430 = vunpack.c.l.b16 %v90
  %v431 = vunpack.c.h.b16 %v90
  %v432 = vunpack.c.l.b16 %v91
  %v433 = vunpack.c.h.b16 %v91
  %v434 = vunpack.c.l.b16 %v92
  %v435 = vunpack.c.h.b16 %v92
  %v436 = vunpack.c.l.b16 %v93
  %v437 = vunpack.c.h.b16 %v93
  %v438 = vunpack.c.l.b16 %v94
  %v439 = vunpack.c.h.b16 %v94
  %v440 = vunpack.c.l.b16 %v95
  %v441 = vunpack.c.h.b16 %v95
  %v442 = vunpack.c.l.b16 %v96
  %v443 = vunpack.c.h.b16 %v96
  %v444 = vunpack.c.l.b16 %v97
  %v445 = vunpack.c.h.b16 %v97
  %v446 = vunpack.c.l.b16 %v98
  %v447 = vunpack.c.h.b16 %v98
  %v448 = vunpack.c.l.b16 %v99
  %v449 = vunpack.c.h.b16 %v99
  %v450 = vunpack.c.l.b16 %v100
  %v451 = vunpack.c.h.b16 %v100
  %v452 = vunpack.c.l.b16 %v101
  %v453 = vunpack.c.h.b16 %v101
  %v454 = vunpack.c.l.b16 %v102
  %v455 = vunpack.c.h.b16 %v102
  %v456 = vunpack.c.l.b16 %v103
  %v457 = vunpack.c.h.b16 %v103
  %v458 = vunpack.c.l.b16 %v104
  %v459 = vunpack.c.h.b16 %v104
  %v460 = vunpack.c.l.b16 %v105
  %v461 = vunpack.c.h.b16 %v105
  %v462 = vunpack.c.l.b16 %v106
  %v463 = vunpack.c.h.b16 %v106
  %v464 = vunpack.c.l.b16 %v107
  %v465 = vunpack.c.h.b16 %v107
  %v466 = vunpack.c.l.b16 %v108
  %v467 = vunpack.c.h.b16 %v108
  %v468 = vunpack.c.l.b16 %v109
  %v469 = vunpack.c.h.b16 %v109
  %v470 = vunpack.c.l.b16 %v110
  %v471 = vunpack.c.h.b16 %v110
  %v472 = vunpack.c.l.b16 %v111
  %v473 = vunpack.c.h.b16 %v111
  %v474 = vunpack.c.l.b16 %v112
  %v475 = vunpack.c.h.b16 %v112
  %v476 = vunpack.c.l.b16 %v113
  %v477 = vunpack.c.h.b16 %v113
  %v478 = vunpack.c.l.b16 %v114
  %v479 = vunpack.c.h.b16 %v114
  %v480 = vunpack.c.l.b16 %v115
  %v481 = vunpack.c.h.b16 %v115
  %v482 = vunpack.c.l.b16 %v116
  %v483 = vunpack.c.h.b16 %v116
  %v484 = vunpack.c.l.b16 %v117
  %v485 = vunpack.c.h.b16 %v117
  %v486 = vunpack.c.l.b16 %v118
  %v487 = vunpack.c.h.b16 %v118
  %v488 = vunpack.c.l.b16 %v119
  %v489 = vunpack.c.h.b16 %v119
  %v490 = vunpack.c.l.b16 %v120
  %v491 = vunpack.c.h.b16 %v120
  %v492 = vunpack.c.l.b16 %v121
  %v493 = vunpack.c.h.b16 %v121
  %v494 = vunpack.c.l.b16 %v122
  %v495 = vunpack.c.h.b16 %v122
  %v496 = vunpack.c.l.b16 %v123
  %v497 = vunpack.c.h.b16 %v123
  %v498 = vunpack.c.l.b16 %v124
  %v499 = vunpack.c.h.b16 %v124
  %v500 = vunpack.c.l.b16 %v125
  %v501 = vunpack.c.h.b16 %v125
  %v502 = vunpack.c.l.b16 %v126
  %v503 = vunpack.c.h.b16 %v126
  %v504 = vunpack.c.l.b16 %v127
  %v505 = vunpack.c.h.b16 %v127
  %v506 = vunpack.c.l.b16 %v128
  %v507 = vunpack.c.h.b16 %v128
  %v508 = vunpack.c.l.b16 %v129
  %v509 = vunpack.c.h.b16 %v129
  %v510 = vunpack.c.l.b16 %v130
  %v511 = vunpack.c.h.b16 %v130
  %v512 = vunpack.c.l.b16 %v131
  %v513 = vunpack.c.h.b16 %v131
  %v514 = vunpack.c.l.b16 %v132
  %v515 = vunpack.c.h.b16 %v132
  %v516 = vunpack.c.l.b16 %v133
  %v517 = vunpack.c.h.b16 %v133
  %v518 = vunpack.c.l.b16 %v134
  %v519 = vunpack.c.h.b16 %v134
  %v520 = vunpack.c.l.b16 %v135
  %v521 = vunpack.c.h.b16 %v135
  %v522 = vunpack.c.l.b16 %v136
  %v523 = vunpack.c.h.b16 %v136
  %v524 = vunpack.c.l.b16 %v137
  %v525 = vunpack.c.h.b16 %v137
  %v526 = vunpack.c.l.b16 %v138
  %v527 = vunpack.c.h.b16 %v138
  %v528 = vunpack.c.l.b16 %v139
  %v529 = vunpack.c.h.b16 %v139
  %v530 = vunpack.c.l.b16 %v140
  %v531 = vunpack.c.h.b16 %v140
  %v532 = vunpack.c.l.b16 %v141
  %v533 = vunpack.c.h.b16 %v141
  %v534 = vunpack.c.l.b16 %v142
  %v535 = vunpack.c.h.b16 %v142
  %v536 = vunpack.c.l.b16 %v143
  %v537 = vunpack.c.h.b16 %v143
  %v538 = vunpack.c.l.b16 %v144
  %v539 = vunpack.c.h.b16 %v144
  %v540 = vunpack.c.l.b16 %v145
  %v541 = vunpack.c.h.b16 %v145
  %v542 = vunpack.c.l.b16 %v146
  %v543 = vunpack.c.h.b16 %v146
  %v544 = vunpack.c.l.b16 %v147
  %v545 = vunpack.c.h.b16 %v147
  %v546 = vpack.c.b16 %v294, %v290
  %v547 = vpack.c.b16 %v295, %v291
  %v548 = vpack.c.b16 %v296, %v292
  %v549 = vpack.c.b16 %v297, %v293
  %v550 = vpack.c.b16 %v302, %v298
  %v551 = vpack.c.b16 %v303, %v299
  %v552 = vpack.c.b16 %v304, %v300
  %v553 = vpack.c.b16 %v305, %v301
  %v554 = vpack.c.b16 %v310, %v306
  %v555 = vpack.c.b16 %v311, %v307
  %v556 = vpack.c.b16 %v312, %v308
  %v557 = vpack.c.b16 %v313, %v309
  %v558 = vpack.c.b16 %v318, %v314
  %v559 = vpack.c.b16 %v319, %v315
  %v560 = vpack.c.b16 %v320, %v316
  %v561 = vpack.c.b16 %v321, %v317
  %v562 = vpack.c.b16 %v326, %v322
  %v563 = vpack.c.b16 %v327, %v323
  %v564 = vpack.c.b16 %v328, %v324
  %v565 = vpack.c.b16 %v329, %v325
  %v566 = vpack.c.b16 %v334, %v330
  %v567 = vpack.c.b16 %v335, %v331
  %v568 = vpack.c.b16 %v336, %v332
  %v569 = vpack.c.b16 %v337, %v333
  %v570 = vpack.c.b16 %v342, %v338
  %v571 = vpack.c.b16 %v343, %v339
  %v572 = vpack.c.b16 %v344, %v340
  %v573 = vpack.c.b16 %v345, %v341
  %v574 = vpack.c.b16 %v350, %v346
  %v575 = vpack.c.b16 %v351, %v347
  %v576 = vpack.c.b16 %v352, %v348
  %v577 = vpack.c.b16 %v353, %v349
  %v578 = vpack.c.b16 %v358, %v354
  %v579 = vpack.c.b16 %v359, %v355
  %v580 = vpack.c.b16 %v360, %v356
  %v581 = vpack.c.b16 %v361, %v357
  %v582 = vpack.c.b16 %v366, %v362
  %v583 = vpack.c.b16 %v367, %v363
  %v584 = vpack.c.b16 %v368, %v364
  %v585 = vpack.c.b16 %v369, %v365
  %v586 = vpack.c.b16 %v374, %v370
  %v587 = vpack.c.b16 %v375, %v371
  %v588 = vpack.c.b16 %v376, %v372
  %v589 = vpack.c.b16 %v377, %v373
  %v590 = vpack.c.b16 %v382, %v378
  %v591 = vpack.c.b16 %v383, %v379
  %v592 = vpack.c.b16 %v384, %v380
  %v593 = vpack.c.b16 %v385, %v381
  %v594 = vpack.c.b16 %v390, %v386
  %v595 = vpack.c.b16 %v391, %v387
  %v596 = vpack.c.b16 %v392, %v388
  %v597 = vpack.c.b16 %v393, %v389
  %v598 = vpack.c.b16 %v398, %v394
  %v599 = vpack.c.b16 %v399, %v395
  %v600 = vpack.c.b16 %v400, %v396
  %v601 = vpack.c.b16 %v401, %v397
  %v602 = vpack.c.b16 %v406, %v402
  %v603 = vpack.c.b16 %v407, %v403
  %v604 = vpack.c.b16 %v408, %v404
  %v605 = vpack.c.b16 %v409, %v405
  %v606 = vpack.c.b16 %v414, %v410
  %v607 = vpack.c.b16 %v415, %v411
  %v608 = vpack.c.b16 %v416, %v412
  %v609 = vpack.c.b16 %v417, %v413
  %v610 = vpack.c.b16 %v422, %v418
  %v611 = vpack.c.b16 %v423, %v419
  %v612 = vpack.c.b16 %v424, %v420
  %v613 = vpack.c.b16 %v425, %v421
  %v614 = vpack.c.b16 %v430, %v426
  %v615 = vpack.c.b16 %v431, %v427
  %v616 = vpack.c.b16 %v432, %v428
  %v617 = vpack.c.b16 %v433, %v429
  %v618 = vpack.c.b16 %v438, %v434
  %v619 = vpack.c.b16 %v439, %v435
  %v620 = vpack.c.b16 %v440, %v436
  %v621 = vpack.c.b16 %v441, %v437
  %v622 = vpack.c.b16 %v446, %v442
  %v623 = vpack.c.b16 %v447, %v443
  %v624 = vpack.c.b16 %v448, %v444
  %v625 = vpack.c.b16 %v449, %v445
  %v626 = vpack.c.b16 %v454, %v450
  %v627 = vpack.c.b16 %v455, %v451
  %v628 = vpack.c.b16 %v456, %v452
  %v629 = vpack.c.b16 %v457, %v453
  %v630 = vpack.c.b16 %v462, %v458
  %v631 = vpack.c.b16 %v463, %v459
  %v632 = vpack.c.b16 %v464, %v460
  %v633 = vpack.c.b16 %v465, %v461
  %v634 = vpack.c.b16 %v470, %v466
  %v635 = vpack.c.b16 %v471, %v467
  %v636 = vpack.c.b16 %v472, %v468
  %v637 = vpack.c.b16 %v473, %v469
  %v638 = vpack.c.b16 %v478, %v474
  %v639 = vpack.c.b16 %v479, %v475
  %v640 = vpack.c.b16 %v480, %v476
  %v641 = vpack.c.b16 %v481, %v477
  %v642 = vpack.c.b16 %v486, %v482
  %v643 = vpack.c.b16 %v487, %v483
  %v644 = vpack.c.b16 %v488, %v484
  %v645 = vpack.c.b16 %v489, %v485
  %v646 = vpack.c.b16 %v494, %v490
  %v647 = vpack.c.b16 %v495, %v491
  %v648 = vpack.c.b16 %v496, %v492
  %v649 = vpack.c.b16 %v497, %v493
  %v650 = vpack.c.b16 %v502, %v498
  %v651 = vpack.c.b16 %v503, %v499
  %v652 = vpack.c.b16 %v504, %v500
  %v653 = vpack.c.b16 %v505, %v501
  %v654 = vpack.c.b16 %v510, %v506
  %v655 = vpack.c.b16 %v511, %v507
  %v656 = vpack.c.b16 %v512, %v508
  %v657 = vpack.c.b16 %v513, %v509
  %v658 = vpack.c.b16 %v518, %v514
  %v659 = vpack.c.b16 %v519, %v515
  %v660 = vpack.c.b16 %v520, %v516
  %v661 = vpack.c.b16 %v521, %v517
  %v662 = vpack.c.b16 %v526, %v522
  %v663 = vpack.c.b16 %v527, %v523
  %v664 = vpack.c.b16 %v528, %v524
  %v665 = vpack.c.b16 %v529, %v525
  %v666 = vpack.c.b16 %v534, %v530
  %v667 = vpack.c.b16 %v535, %v531
  %v668 = vpack.c.b16 %v536, %v532
  %v669 = vpack.c.b16 %v537, %v533
  %v670 = vpack.c.b16 %v542, %v538
  %v671 = vpack.c.b16 %v543, %v539
  %v672 = vpack.c.b16 %v544, %v540
  %v673 = vpack.c.b16 %v545, %v541
  %802 = vmatprep.subr.bf16.mxu0 %v547
  %803 = vmatpush1.bf16.msra.mxu0 %v546
  %804 = vmatprep.subr.bf16.mxu0 %v551
  %805 = vmatpush1.bf16.msra.mxu0 %v550
  %806 = vmatprep.subr.bf16.mxu0 %v555
  %807 = vmatpush1.bf16.msra.mxu0 %v554
  %808 = vmatprep.subr.bf16.mxu0 %v559
  %809 = vmatpush1.bf16.msra.mxu0 %v558
  %810 = vmatprep.subr.bf16.mxu0 %v563
  %811 = vmatpush1.bf16.msra.mxu0 %v562
  %812 = vmatprep.subr.bf16.mxu0 %v567
  %813 = vmatpush1.bf16.msra.mxu0 %v566
  %814 = vmatprep.subr.bf16.mxu0 %v571
  %815 = vmatpush1.bf16.msra.mxu0 %v570
  %816 = vmatprep.subr.bf16.mxu0 %v575
  %817 = vmatpush1.bf16.msra.mxu0 %v574
  %818 = vmatprep.subr.bf16.mxu0 %v579
  %819 = vmatpush1.bf16.msra.mxu0 %v578
  %820 = vmatprep.subr.bf16.mxu0 %v583
  %821 = vmatpush1.bf16.msra.mxu0 %v582
  %822 = vmatprep.subr.bf16.mxu0 %v587
  %823 = vmatpush1.bf16.msra.mxu0 %v586
  %824 = vmatprep.subr.bf16.mxu0 %v591
  %825 = vmatpush1.bf16.msra.mxu0 %v590
  %826 = vmatprep.subr.bf16.mxu0 %v595
  %827 = vmatpush1.bf16.msra.mxu0 %v594
  %828 = vmatprep.subr.bf16.mxu0 %v599
  %829 = vmatpush1.bf16.msra.mxu0 %v598
  %830 = vmatprep.subr.bf16.mxu0 %v603
  %831 = vmatpush1.bf16.msra.mxu0 %v602
  %832 = vmatprep.subr.bf16.mxu0 %v607
  %833 = vmatpush1.bf16.msra.mxu0 %v606
  %834 = vmatprep.mubr.bf16.mxu0 %v155
  %835 = vmatmul.mubr.bf16.gmra.mrb[0].mxu0 %v154
  %v836 = vpop.f32.mrb[0].mxu0
  %v837 = vadd.f32 0.0, %v836
  %v838 = vpop.f32.mrb[0].mxu0
  %v839 = vadd.f32 0.0, %v838
  %v840 = vpop.f32.mrb[0].mxu0
  %v841 = vpop.f32.mrb[0].mxu0
  %842 = vdwg.mxu0
  %843 = vmatprep.subr.bf16.mxu0 %v611
  %844 = vmatpush1.bf16.msra.mxu0 %v610
  %845 = vmatprep.subr.bf16.mxu0 %v615
  %846 = vmatpush1.bf16.msra.mxu0 %v614
  %847 = vmatprep.subr.bf16.mxu0 %v619
  %848 = vmatpush1.bf16.msra.mxu0 %v618
  %849 = vmatprep.subr.bf16.mxu0 %v623
  %850 = vmatpush1.bf16.msra.mxu0 %v622
  %851 = vmatprep.subr.bf16.mxu0 %v627
  %852 = vmatpush1.bf16.msra.mxu0 %v626
  %853 = vmatprep.subr.bf16.mxu0 %v631
  %854 = vmatpush1.bf16.msra.mxu0 %v630
  %855 = vmatprep.subr.bf16.mxu0 %v635
  %856 = vmatpush1.bf16.msra.mxu0 %v634
  %857 = vmatprep.subr.bf16.mxu0 %v639
  %858 = vmatpush1.bf16.msra.mxu0 %v638
  %859 = vmatprep.subr.bf16.mxu0 %v643
  %860 = vmatpush1.bf16.msra.mxu0 %v642
  %861 = vmatprep.subr.bf16.mxu0 %v647
  %862 = vmatpush1.bf16.msra.mxu0 %v646
  %863 = vmatprep.subr.bf16.mxu0 %v651
  %864 = vmatpush1.bf16.msra.mxu0 %v650
  %865 = vmatprep.subr.bf16.mxu0 %v655
  %866 = vmatpush1.bf16.msra.mxu0 %v654
  %867 = vmatprep.subr.bf16.mxu0 %v659
  %868 = vmatpush1.bf16.msra.mxu0 %v658
  %869 = vmatprep.subr.bf16.mxu0 %v663
  %870 = vmatpush1.bf16.msra.mxu0 %v662
  %871 = vmatprep.subr.bf16.mxu0 %v667
  %872 = vmatpush1.bf16.msra.mxu0 %v666
  %873 = vmatprep.subr.bf16.mxu0 %v671
  %874 = vmatpush1.bf16.msra.mxu0 %v670
  %875 = vmatprep.mubr.bf16.mxu0 %v157
  %876 = vmatmul.mubr.bf16.gmra.mrb[0].mxu0 %v156
  %v877 = vpop.f32.mrb[0].mxu0
  %v878 = vadd.f32 %v837, %v877
  %v879 = vpop.f32.mrb[0].mxu0
  %v880 = vadd.f32 %v839, %v879
  %v881 = vpop.f32.mrb[0].mxu0
  %v882 = vpop.f32.mrb[0].mxu0
  %883 = vdwg.mxu0
  %884 = vmatprep.subr.bf16.mxu0 %v549
  %885 = vmatpush1.bf16.msra.mxu0 %v548
  %886 = vmatprep.subr.bf16.mxu0 %v553
  %887 = vmatpush1.bf16.msra.mxu0 %v552
  %888 = vmatprep.subr.bf16.mxu0 %v557
  %889 = vmatpush1.bf16.msra.mxu0 %v556
  %890 = vmatprep.subr.bf16.mxu0 %v561
  %891 = vmatpush1.bf16.msra.mxu0 %v560
  %892 = vmatprep.subr.bf16.mxu0 %v565
  %893 = vmatpush1.bf16.msra.mxu0 %v564
  %894 = vmatprep.subr.bf16.mxu0 %v569
  %895 = vmatpush1.bf16.msra.mxu0 %v568
  %896 = vmatprep.subr.bf16.mxu0 %v573
  %897 = vmatpush1.bf16.msra.mxu0 %v572
  %898 = vmatprep.subr.bf16.mxu0 %v577
  %899 = vmatpush1.bf16.msra.mxu0 %v576
  %900 = vmatprep.subr.bf16.mxu0 %v581
  %901 = vmatpush1.bf16.msra.mxu0 %v580
  %902 = vmatprep.subr.bf16.mxu0 %v585
  %903 = vmatpush1.bf16.msra.mxu0 %v584
  %904 = vmatprep.subr.bf16.mxu0 %v589
  %905 = vmatpush1.bf16.msra.mxu0 %v588
  %906 = vmatprep.subr.bf16.mxu0 %v593
  %907 = vmatpush1.bf16.msra.mxu0 %v592
  %908 = vmatprep.subr.bf16.mxu0 %v597
  %909 = vmatpush1.bf16.msra.mxu0 %v596
  %910 = vmatprep.subr.bf16.mxu0 %v601
  %911 = vmatpush1.bf16.msra.mxu0 %v600
  %912 = vmatprep.subr.bf16.mxu0 %v605
  %913 = vmatpush1.bf16.msra.mxu0 %v604
  %914 = vmatprep.subr.bf16.mxu0 %v609
  %915 = vmatpush1.bf16.msra.mxu0 %v608
  %916 = vmatprep.mubr.bf16.mxu0 %v155
  %917 = vmatmul.mubr.bf16.gmra.mrb[0].mxu0 %v154
  %v918 = vpop.f32.mrb[0].mxu0
  %v919 = vadd.f32 0.0, %v918
  %v920 = vpop.f32.mrb[0].mxu0
  %v921 = vadd.f32 0.0, %v920
  %v922 = vpop.f32.mrb[0].mxu0
  %v923 = vpop.f32.mrb[0].mxu0
  %924 = vdwg.mxu0
  %925 = vmatprep.subr.bf16.mxu0 %v613
  %926 = vmatpush1.bf16.msra.mxu0 %v612
  %927 = vmatprep.subr.bf16.mxu0 %v617
  %928 = vmatpush1.bf16.msra.mxu0 %v616
  %929 = vmatprep.subr.bf16.mxu0 %v621
  %930 = vmatpush1.bf16.msra.mxu0 %v620
  %931 = vmatprep.subr.bf16.mxu0 %v625
  %932 = vmatpush1.bf16.msra.mxu0 %v624
  %933 = vmatprep.subr.bf16.mxu0 %v629
  %934 = vmatpush1.bf16.msra.mxu0 %v628
  %935 = vmatprep.subr.bf16.mxu0 %v633
  %936 = vmatpush1.bf16.msra.mxu0 %v632
  %937 = vmatprep.subr.bf16.mxu0 %v637
  %938 = vmatpush1.bf16.msra.mxu0 %v636
  %939 = vmatprep.subr.bf16.mxu0 %v641
  %940 = vmatpush1.bf16.msra.mxu0 %v640
  %941 = vmatprep.subr.bf16.mxu0 %v645
  %942 = vmatpush1.bf16.msra.mxu0 %v644
  %943 = vmatprep.subr.bf16.mxu0 %v649
  %944 = vmatpush1.bf16.msra.mxu0 %v648
  %945 = vmatprep.subr.bf16.mxu0 %v653
  %946 = vmatpush1.bf16.msra.mxu0 %v652
  %947 = vmatprep.subr.bf16.mxu0 %v657
  %948 = vmatpush1.bf16.msra.mxu0 %v656
  %949 = vmatprep.subr.bf16.mxu0 %v661
  %950 = vmatpush1.bf16.msra.mxu0 %v660
  %951 = vmatprep.subr.bf16.mxu0 %v665
  %952 = vmatpush1.bf16.msra.mxu0 %v664
  %953 = vmatprep.subr.bf16.mxu0 %v669
  %954 = vmatpush1.bf16.msra.mxu0 %v668
  %955 = vmatprep.subr.bf16.mxu0 %v673
  %956 = vmatpush1.bf16.msra.mxu0 %v672
  %957 = vmatprep.mubr.bf16.mxu0 %v157
  %958 = vmatmul.mubr.bf16.gmra.mrb[0].mxu0 %v156
  %v959 = vpop.f32.mrb[0].mxu0
  %v960 = vadd.f32 %v919, %v959
  %v961 = vpop.f32.mrb[0].mxu0
  %v962 = vadd.f32 %v921, %v961
  %v963 = vpop.f32.mrb[0].mxu0
  %v964 = vpop.f32.mrb[0].mxu0
  %965 = vdwg.mxu0
  %v966 = vmax.f32 %v878, 0.0
  %v967 = vmax.f32 %v880, 0.0
  %v968 = vmax.f32 %v960, 0.0
  %v969 = vmax.f32 %v962, 0.0
  %v970 = vpack.c.bf16 %v966, %v966
  %v971 = vpack.c.bf16 %v967, %v967
  %v972 = vpack.c.bf16 %v968, %v968
  %v973 = vpack.c.bf16 %v969, %v969
  %v974 = vld [vmem:[%s2] sm:$0xff]
  %v975 = vld [vmem:[%s2 + $0x8] sm:$0xff]
  %v976 = vld [vmem:[%s2 + $0x10] sm:$0xff]
  %v977 = vld [vmem:[%s2 + $0x18] sm:$0xff]
  %v978 = vld [vmem:[%s2 + $0x20] sm:$0xff]
  %v979 = vld [vmem:[%s2 + $0x28] sm:$0xff]
  %v980 = vld [vmem:[%s2 + $0x30] sm:$0xff]
  %v981 = vld [vmem:[%s2 + $0x38] sm:$0xff]
  %v982 = vld [vmem:[%s2 + $0x40] sm:$0xff]
  %v983 = vld [vmem:[%s2 + $0x48] sm:$0xff]
  %v984 = vld [vmem:[%s2 + $0x50] sm:$0xff]
  %v985 = vld [vmem:[%s2 + $0x58] sm:$0xff]
  %v986 = vld [vmem:[%s2 + $0x60] sm:$0xff]
  %v987 = vld [vmem:[%s2 + $0x68] sm:$0xff]
  %v988 = vld [vmem:[%s2 + $0x70] sm:$0xff]
  %v989 = vld [vmem:[%s2 + $0x78] sm:$0xff]
  %v990 = vld [vmem:[%s2 + $0x80] sm:$0xff]
  %v991 = vld [vmem:[%s2 + $0x88] sm:$0xff]
  %v992 = vld [vmem:[%s2 + $0x90] sm:$0xff]
  %v993 = vld [vmem:[%s2 + $0x98] sm:$0xff]
  %v994 = vld [vmem:[%s2 + $0xa0] sm:$0xff]
  %v995 = vld [vmem:[%s2 + $0xa8] sm:$0xff]
  %v996 = vld [vmem:[%s2 + $0xb0] sm:$0xff]
  %v997 = vld [vmem:[%s2 + $0xb8] sm:$0xff]
  %v998 = vld [vmem:[%s2 + $0xc0] sm:$0xff]
  %v999 = vld [vmem:[%s2 + $0xc8] sm:$0xff]
  %v1000 = vld [vmem:[%s2 + $0xd0] sm:$0xff]
  %v1001 = vld [vmem:[%s2 + $0xd8] sm:$0xff]
  %v1002 = vld [vmem:[%s2 + $0xe0] sm:$0xff]
  %v1003 = vld [vmem:[%s2 + $0xe8] sm:$0xff]
  %v1004 = vld [vmem:[%s2 + $0xf0] sm:$0xff]
  %v1005 = vld [vmem:[%s2 + $0xf8] sm:$0xff]
  %v1006 = vld [vmem:[%s2 + $0x100] sm:$0xff]
  %v1007 = vld [vmem:[%s2 + $0x108] sm:$0xff]
  %v1008 = vld [vmem:[%s2 + $0x110] sm:$0xff]
  %v1009 = vld [vmem:[%s2 + $0x118] sm:$0xff]
  %v1010 = vld [vmem:[%s2 + $0x120] sm:$0xff]
  %v1011 = vld [vmem:[%s2 + $0x128] sm:$0xff]
  %v1012 = vld [vmem:[%s2 + $0x130] sm:$0xff]
  %v1013 = vld [vmem:[%s2 + $0x138] sm:$0xff]
  %v1014 = vld [vmem:[%s2 + $0x140] sm:$0xff]
  %v1015 = vld [vmem:[%s2 + $0x148] sm:$0xff]
  %v1016 = vld [vmem:[%s2 + $0x150] sm:$0xff]
  %v1017 = vld [vmem:[%s2 + $0x158] sm:$0xff]
  %v1018 = vld [vmem:[%s2 + $0x160] sm:$0xff]
  %v1019 = vld [vmem:[%s2 + $0x168] sm:$0xff]
  %v1020 = vld [vmem:[%s2 + $0x170] sm:$0xff]
  %v1021 = vld [vmem:[%s2 + $0x178] sm:$0xff]
  %v1022 = vld [vmem:[%s2 + $0x180] sm:$0xff]
  %v1023 = vld [vmem:[%s2 + $0x188] sm:$0xff]
  %v1024 = vld [vmem:[%s2 + $0x190] sm:$0xff]
  %v1025 = vld [vmem:[%s2 + $0x198] sm:$0xff]
  %v1026 = vld [vmem:[%s2 + $0x1a0] sm:$0xff]
  %v1027 = vld [vmem:[%s2 + $0x1a8] sm:$0xff]
  %v1028 = vld [vmem:[%s2 + $0x1b0] sm:$0xff]
  %v1029 = vld [vmem:[%s2 + $0x1b8] sm:$0xff]
  %v1030 = vld [vmem:[%s2 + $0x1c0] sm:$0xff]
  %v1031 = vld [vmem:[%s2 + $0x1c8] sm:$0xff]
  %v1032 = vld [vmem:[%s2 + $0x1d0] sm:$0xff]
  %v1033 = vld [vmem:[%s2 + $0x1d8] sm:$0xff]
  %v1034 = vld [vmem:[%s2 + $0x1e0] sm:$0xff]
  %v1035 = vld [vmem:[%s2 + $0x1e8] sm:$0xff]
  %v1036 = vld [vmem:[%s2 + $0x1f0] sm:$0xff]
  %v1037 = vld [vmem:[%s2 + $0x1f8] sm:$0xff]
  %v1102 = vunpack.c.l.b16 %v974
  %v1103 = vunpack.c.h.b16 %v974
  %v1104 = vunpack.c.l.b16 %v975
  %v1105 = vunpack.c.h.b16 %v975
  %v1106 = vunpack.c.l.b16 %v976
  %v1107 = vunpack.c.h.b16 %v976
  %v1108 = vunpack.c.l.b16 %v977
  %v1109 = vunpack.c.h.b16 %v977
  %v1110 = vunpack.c.l.b16 %v978
  %v1111 = vunpack.c.h.b16 %v978
  %v1112 = vunpack.c.l.b16 %v979
  %v1113 = vunpack.c.h.b16 %v979
  %v1114 = vunpack.c.l.b16 %v980
  %v1115 = vunpack.c.h.b16 %v980
  %v1116 = vunpack.c.l.b16 %v981
  %v1117 = vunpack.c.h.b16 %v981
  %v1118 = vunpack.c.l.b16 %v982
  %v1119 = vunpack.c.h.b16 %v982
  %v1120 = vunpack.c.l.b16 %v983
  %v1121 = vunpack.c.h.b16 %v983
  %v1122 = vunpack.c.l.b16 %v984
  %v1123 = vunpack.c.h.b16 %v984
  %v1124 = vunpack.c.l.b16 %v985
  %v1125 = vunpack.c.h.b16 %v985
  %v1126 = vunpack.c.l.b16 %v986
  %v1127 = vunpack.c.h.b16 %v986
  %v1128 = vunpack.c.l.b16 %v987
  %v1129 = vunpack.c.h.b16 %v987
  %v1130 = vunpack.c.l.b16 %v988
  %v1131 = vunpack.c.h.b16 %v988
  %v1132 = vunpack.c.l.b16 %v989
  %v1133 = vunpack.c.h.b16 %v989
  %v1134 = vunpack.c.l.b16 %v990
  %v1135 = vunpack.c.h.b16 %v990
  %v1136 = vunpack.c.l.b16 %v991
  %v1137 = vunpack.c.h.b16 %v991
  %v1138 = vunpack.c.l.b16 %v992
  %v1139 = vunpack.c.h.b16 %v992
  %v1140 = vunpack.c.l.b16 %v993
  %v1141 = vunpack.c.h.b16 %v993
  %v1142 = vunpack.c.l.b16 %v994
  %v1143 = vunpack.c.h.b16 %v994
  %v1144 = vunpack.c.l.b16 %v995
  %v1145 = vunpack.c.h.b16 %v995
  %v1146 = vunpack.c.l.b16 %v996
  %v1147 = vunpack.c.h.b16 %v996
  %v1148 = vunpack.c.l.b16 %v997
  %v1149 = vunpack.c.h.b16 %v997
  %v1150 = vunpack.c.l.b16 %v998
  %v1151 = vunpack.c.h.b16 %v998
  %v1152 = vunpack.c.l.b16 %v999
  %v1153 = vunpack.c.h.b16 %v999
  %v1154 = vunpack.c.l.b16 %v1000
  %v1155 = vunpack.c.h.b16 %v1000
  %v1156 = vunpack.c.l.b16 %v1001
  %v1157 = vunpack.c.h.b16 %v1001
  %v1158 = vunpack.c.l.b16 %v1002
  %v1159 = vunpack.c.h.b16 %v1002
  %v1160 = vunpack.c.l.b16 %v1003
  %v1161 = vunpack.c.h.b16 %v1003
  %v1162 = vunpack.c.l.b16 %v1004
  %v1163 = vunpack.c.h.b16 %v1004
  %v1164 = vunpack.c.l.b16 %v1005
  %v1165 = vunpack.c.h.b16 %v1005
  %v1166 = vunpack.c.l.b16 %v1006
  %v1167 = vunpack.c.h.b16 %v1006
  %v1168 = vunpack.c.l.b16 %v1007
  %v1169 = vunpack.c.h.b16 %v1007
  %v1170 = vunpack.c.l.b16 %v1008
  %v1171 = vunpack.c.h.b16 %v1008
  %v1172 = vunpack.c.l.b16 %v1009
  %v1173 = vunpack.c.h.b16 %v1009
  %v1174 = vunpack.c.l.b16 %v1010
  %v1175 = vunpack.c.h.b16 %v1010
  %v1176 = vunpack.c.l.b16 %v1011
  %v1177 = vunpack.c.h.b16 %v1011
  %v1178 = vunpack.c.l.b16 %v1012
  %v1179 = vunpack.c.h.b16 %v1012
  %v1180 = vunpack.c.l.b16 %v1013
  %v1181 = vunpack.c.h.b16 %v1013
  %v1182 = vunpack.c.l.b16 %v1014
  %v1183 = vunpack.c.h.b16 %v1014
  %v1184 = vunpack.c.l.b16 %v1015
  %v1185 = vunpack.c.h.b16 %v1015
  %v1186 = vunpack.c.l.b16 %v1016
  %v1187 = vunpack.c.h.b16 %v1016
  %v1188 = vunpack.c.l.b16 %v1017
  %v1189 = vunpack.c.h.b16 %v1017
  %v1190 = vunpack.c.l.b16 %v1018
  %v1191 = vunpack.c.h.b16 %v1018
  %v1192 = vunpack.c.l.b16 %v1019
  %v1193 = vunpack.c.h.b16 %v1019
  %v1194 = vunpack.c.l.b16 %v1020
  %v1195 = vunpack.c.h.b16 %v1020
  %v1196 = vunpack.c.l.b16 %v1021
  %v1197 = vunpack.c.h.b16 %v1021
  %v1198 = vunpack.c.l.b16 %v1022
  %v1199 = vunpack.c.h.b16 %v1022
  %v1200 = vunpack.c.l.b16 %v1023
  %v1201 = vunpack.c.h.b16 %v1023
  %v1202 = vunpack.c.l.b16 %v1024
  %v1203 = vunpack.c.h.b16 %v1024
  %v1204 = vunpack.c.l.b16 %v1025
  %v1205 = vunpack.c.h.b16 %v1025
  %v1206 = vunpack.c.l.b16 %v1026
  %v1207 = vunpack.c.h.b16 %v1026
  %v1208 = vunpack.c.l.b16 %v1027
  %v1209 = vunpack.c.h.b16 %v1027
  %v1210 = vunpack.c.l.b16 %v1028
  %v1211 = vunpack.c.h.b16 %v1028
  %v1212 = vunpack.c.l.b16 %v1029
  %v1213 = vunpack.c.h.b16 %v1029
  %v1214 = vunpack.c.l.b16 %v1030
  %v1215 = vunpack.c.h.b16 %v1030
  %v1216 = vunpack.c.l.b16 %v1031
  %v1217 = vunpack.c.h.b16 %v1031
  %v1218 = vunpack.c.l.b16 %v1032
  %v1219 = vunpack.c.h.b16 %v1032
  %v1220 = vunpack.c.l.b16 %v1033
  %v1221 = vunpack.c.h.b16 %v1033
  %v1222 = vunpack.c.l.b16 %v1034
  %v1223 = vunpack.c.h.b16 %v1034
  %v1224 = vunpack.c.l.b16 %v1035
  %v1225 = vunpack.c.h.b16 %v1035
  %v1226 = vunpack.c.l.b16 %v1036
  %v1227 = vunpack.c.h.b16 %v1036
  %v1228 = vunpack.c.l.b16 %v1037
  %v1229 = vunpack.c.h.b16 %v1037
  %v1230 = vpack.c.b16 %v1104, %v1102
  %v1231 = vpack.c.b16 %v1105, %v1103
  %v1232 = vpack.c.b16 %v1108, %v1106
  %v1233 = vpack.c.b16 %v1109, %v1107
  %v1234 = vpack.c.b16 %v1112, %v1110
  %v1235 = vpack.c.b16 %v1113, %v1111
  %v1236 = vpack.c.b16 %v1116, %v1114
  %v1237 = vpack.c.b16 %v1117, %v1115
  %v1238 = vpack.c.b16 %v1120, %v1118
  %v1239 = vpack.c.b16 %v1121, %v1119
  %v1240 = vpack.c.b16 %v1124, %v1122
  %v1241 = vpack.c.b16 %v1125, %v1123
  %v1242 = vpack.c.b16 %v1128, %v1126
  %v1243 = vpack.c.b16 %v1129, %v1127
  %v1244 = vpack.c.b16 %v1132, %v1130
  %v1245 = vpack.c.b16 %v1133, %v1131
  %v1246 = vpack.c.b16 %v1136, %v1134
  %v1247 = vpack.c.b16 %v1137, %v1135
  %v1248 = vpack.c.b16 %v1140, %v1138
  %v1249 = vpack.c.b16 %v1141, %v1139
  %v1250 = vpack.c.b16 %v1144, %v1142
  %v1251 = vpack.c.b16 %v1145, %v1143
  %v1252 = vpack.c.b16 %v1148, %v1146
  %v1253 = vpack.c.b16 %v1149, %v1147
  %v1254 = vpack.c.b16 %v1152, %v1150
  %v1255 = vpack.c.b16 %v1153, %v1151
  %v1256 = vpack.c.b16 %v1156, %v1154
  %v1257 = vpack.c.b16 %v1157, %v1155
  %v1258 = vpack.c.b16 %v1160, %v1158
  %v1259 = vpack.c.b16 %v1161, %v1159
  %v1260 = vpack.c.b16 %v1164, %v1162
  %v1261 = vpack.c.b16 %v1165, %v1163
  %v1262 = vpack.c.b16 %v1168, %v1166
  %v1263 = vpack.c.b16 %v1169, %v1167
  %v1264 = vpack.c.b16 %v1172, %v1170
  %v1265 = vpack.c.b16 %v1173, %v1171
  %v1266 = vpack.c.b16 %v1176, %v1174
  %v1267 = vpack.c.b16 %v1177, %v1175
  %v1268 = vpack.c.b16 %v1180, %v1178
  %v1269 = vpack.c.b16 %v1181, %v1179
  %v1270 = vpack.c.b16 %v1184, %v1182
  %v1271 = vpack.c.b16 %v1185, %v1183
  %v1272 = vpack.c.b16 %v1188, %v1186
  %v1273 = vpack.c.b16 %v1189, %v1187
  %v1274 = vpack.c.b16 %v1192, %v1190
  %v1275 = vpack.c.b16 %v1193, %v1191
  %v1276 = vpack.c.b16 %v1196, %v1194
  %v1277 = vpack.c.b16 %v1197, %v1195
  %v1278 = vpack.c.b16 %v1200, %v1198
  %v1279 = vpack.c.b16 %v1201, %v1199
  %v1280 = vpack.c.b16 %v1204, %v1202
  %v1281 = vpack.c.b16 %v1205, %v1203
  %v1282 = vpack.c.b16 %v1208, %v1206
  %v1283 = vpack.c.b16 %v1209, %v1207
  %v1284 = vpack.c.b16 %v1212, %v1210
  %v1285 = vpack.c.b16 %v1213, %v1211
  %v1286 = vpack.c.b16 %v1216, %v1214
  %v1287 = vpack.c.b16 %v1217, %v1215
  %v1288 = vpack.c.b16 %v1220, %v1218
  %v1289 = vpack.c.b16 %v1221, %v1219
  %v1290 = vpack.c.b16 %v1224, %v1222
  %v1291 = vpack.c.b16 %v1225, %v1223
  %v1292 = vpack.c.b16 %v1228, %v1226
  %v1293 = vpack.c.b16 %v1229, %v1227
  %1358 = vmatprep.subr.bf16.mxu0 %v1231
  %1359 = vmatpush1.bf16.msra.mxu0 %v1230
  %1360 = vmatprep.subr.bf16.mxu0 %v1233
  %1361 = vmatpush1.bf16.msra.mxu0 %v1232
  %1362 = vmatprep.subr.bf16.mxu0 %v1235
  %1363 = vmatpush1.bf16.msra.mxu0 %v1234
  %1364 = vmatprep.subr.bf16.mxu0 %v1237
  %1365 = vmatpush1.bf16.msra.mxu0 %v1236
  %1366 = vmatprep.subr.bf16.mxu0 %v1239
  %1367 = vmatpush1.bf16.msra.mxu0 %v1238
  %1368 = vmatprep.subr.bf16.mxu0 %v1241
  %1369 = vmatpush1.bf16.msra.mxu0 %v1240
  %1370 = vmatprep.subr.bf16.mxu0 %v1243
  %1371 = vmatpush1.bf16.msra.mxu0 %v1242
  %1372 = vmatprep.subr.bf16.mxu0 %v1245
  %1373 = vmatpush1.bf16.msra.mxu0 %v1244
  %1374 = vmatprep.subr.bf16.mxu0 %v1247
  %1375 = vmatpush1.bf16.msra.mxu0 %v1246
  %1376 = vmatprep.subr.bf16.mxu0 %v1249
  %1377 = vmatpush1.bf16.msra.mxu0 %v1248
  %1378 = vmatprep.subr.bf16.mxu0 %v1251
  %1379 = vmatpush1.bf16.msra.mxu0 %v1250
  %1380 = vmatprep.subr.bf16.mxu0 %v1253
  %1381 = vmatpush1.bf16.msra.mxu0 %v1252
  %1382 = vmatprep.subr.bf16.mxu0 %v1255
  %1383 = vmatpush1.bf16.msra.mxu0 %v1254
  %1384 = vmatprep.subr.bf16.mxu0 %v1257
  %1385 = vmatpush1.bf16.msra.mxu0 %v1256
  %1386 = vmatprep.subr.bf16.mxu0 %v1259
  %1387 = vmatpush1.bf16.msra.mxu0 %v1258
  %1388 = vmatprep.subr.bf16.mxu0 %v1261
  %1389 = vmatpush1.bf16.msra.mxu0 %v1260
  %1390 = vmatprep.mubr.bf16.mxu0 %v971
  %1391 = vmatmul.mubr.bf16.gmra.mrb[0].mxu0 %v970
  %v1392 = vpop.f32.mrb[0].mxu0
  %v1393 = vadd.f32 0.0, %v1392
  %v1394 = vpop.f32.mrb[0].mxu0
  %v1395 = vadd.f32 0.0, %v1394
  %v1396 = vpop.f32.mrb[0].mxu0
  %v1397 = vpop.f32.mrb[0].mxu0
  %1398 = vdwg.mxu0
  %1399 = vmatprep.subr.bf16.mxu0 %v1263
  %1400 = vmatpush1.bf16.msra.mxu0 %v1262
  %1401 = vmatprep.subr.bf16.mxu0 %v1265
  %1402 = vmatpush1.bf16.msra.mxu0 %v1264
  %1403 = vmatprep.subr.bf16.mxu0 %v1267
  %1404 = vmatpush1.bf16.msra.mxu0 %v1266
  %1405 = vmatprep.subr.bf16.mxu0 %v1269
  %1406 = vmatpush1.bf16.msra.mxu0 %v1268
  %1407 = vmatprep.subr.bf16.mxu0 %v1271
  %1408 = vmatpush1.bf16.msra.mxu0 %v1270
  %1409 = vmatprep.subr.bf16.mxu0 %v1273
  %1410 = vmatpush1.bf16.msra.mxu0 %v1272
  %1411 = vmatprep.subr.bf16.mxu0 %v1275
  %1412 = vmatpush1.bf16.msra.mxu0 %v1274
  %1413 = vmatprep.subr.bf16.mxu0 %v1277
  %1414 = vmatpush1.bf16.msra.mxu0 %v1276
  %1415 = vmatprep.subr.bf16.mxu0 %v1279
  %1416 = vmatpush1.bf16.msra.mxu0 %v1278
  %1417 = vmatprep.subr.bf16.mxu0 %v1281
  %1418 = vmatpush1.bf16.msra.mxu0 %v1280
  %1419 = vmatprep.subr.bf16.mxu0 %v1283
  %1420 = vmatpush1.bf16.msra.mxu0 %v1282
  %1421 = vmatprep.subr.bf16.mxu0 %v1285
  %1422 = vmatpush1.bf16.msra.mxu0 %v1284
  %1423 = vmatprep.subr.bf16.mxu0 %v1287
  %1424 = vmatpush1.bf16.msra.mxu0 %v1286
  %1425 = vmatprep.subr.bf16.mxu0 %v1289
  %1426 = vmatpush1.bf16.msra.mxu0 %v1288
  %1427 = vmatprep.subr.bf16.mxu0 %v1291
  %1428 = vmatpush1.bf16.msra.mxu0 %v1290
  %1429 = vmatprep.subr.bf16.mxu0 %v1293
  %1430 = vmatpush1.bf16.msra.mxu0 %v1292
  %1431 = vmatprep.mubr.bf16.mxu0 %v973
  %1432 = vmatmul.mubr.bf16.gmra.mrb[0].mxu0 %v972
  %v1433 = vpop.f32.mrb[0].mxu0
  %v1434 = vadd.f32 %v1393, %v1433
  %v1435 = vpop.f32.mrb[0].mxu0
  %v1436 = vadd.f32 %v1395, %v1435
  %v1437 = vpop.f32.mrb[0].mxu0
  %v1438 = vpop.f32.mrb[0].mxu0
  %1439 = vdwg.mxu0
  %v1440 = vmax.f32 %v1434, 0.0
  %v1441 = vmax.f32 %v1436, 0.0
  %v1442 = vpack.c.bf16 %v1440, %v1440
  %v1443 = vpack.c.bf16 %v1441, %v1441
  %v1444 = vld [vmem:[%s3] sm:$0xf]
  %v1445 = vld [vmem:[%s3 + $0x4] sm:$0xf]
  %v1446 = vld [vmem:[%s3 + $0x8] sm:$0xf]
  %v1447 = vld [vmem:[%s3 + $0xc] sm:$0xf]
  %v1448 = vld [vmem:[%s3 + $0x10] sm:$0xf]
  %v1449 = vld [vmem:[%s3 + $0x14] sm:$0xf]
  %v1450 = vld [vmem:[%s3 + $0x18] sm:$0xf]
  %v1451 = vld [vmem:[%s3 + $0x1c] sm:$0xf]
  %v1452 = vld [vmem:[%s3 + $0x20] sm:$0xf]
  %v1453 = vld [vmem:[%s3 + $0x24] sm:$0xf]
  %v1454 = vld [vmem:[%s3 + $0x28] sm:$0xf]
  %v1455 = vld [vmem:[%s3 + $0x2c] sm:$0xf]
  %v1456 = vld [vmem:[%s3 + $0x30] sm:$0xf]
  %v1457 = vld [vmem:[%s3 + $0x34] sm:$0xf]
  %v1458 = vld [vmem:[%s3 + $0x38] sm:$0xf]
  %v1459 = vld [vmem:[%s3 + $0x3c] sm:$0xf]
  %v1460 = vld [vmem:[%s3 + $0x40] sm:$0xf]
  %v1461 = vld [vmem:[%s3 + $0x44] sm:$0xf]
  %v1462 = vld [vmem:[%s3 + $0x48] sm:$0xf]
  %v1463 = vld [vmem:[%s3 + $0x4c] sm:$0xf]
  %v1464 = vld [vmem:[%s3 + $0x50] sm:$0xf]
  %v1465 = vld [vmem:[%s3 + $0x54] sm:$0xf]
  %v1466 = vld [vmem:[%s3 + $0x58] sm:$0xf]
  %v1467 = vld [vmem:[%s3 + $0x5c] sm:$0xf]
  %v1468 = vld [vmem:[%s3 + $0x60] sm:$0xf]
  %v1469 = vld [vmem:[%s3 + $0x64] sm:$0xf]
  %v1470 = vld [vmem:[%s3 + $0x68] sm:$0xf]
  %v1471 = vld [vmem:[%s3 + $0x6c] sm:$0xf]
  %v1472 = vld [vmem:[%s3 + $0x70] sm:$0xf]
  %v1473 = vld [vmem:[%s3 + $0x74] sm:$0xf]
  %v1474 = vld [vmem:[%s3 + $0x78] sm:$0xf]
  %v1475 = vld [vmem:[%s3 + $0x7c] sm:$0xf]
  %v1508 = vunpack.c.l.b16 %v1444
  %v1509 = vunpack.c.l.b16 %v1445
  %v1510 = vunpack.c.l.b16 %v1446
  %v1511 = vunpack.c.l.b16 %v1447
  %v1512 = vunpack.c.l.b16 %v1448
  %v1513 = vunpack.c.l.b16 %v1449
  %v1514 = vunpack.c.l.b16 %v1450
  %v1515 = vunpack.c.l.b16 %v1451
  %v1516 = vunpack.c.l.b16 %v1452
  %v1517 = vunpack.c.l.b16 %v1453
  %v1518 = vunpack.c.l.b16 %v1454
  %v1519 = vunpack.c.l.b16 %v1455
  %v1520 = vunpack.c.l.b16 %v1456
  %v1521 = vunpack.c.l.b16 %v1457
  %v1522 = vunpack.c.l.b16 %v1458
  %v1523 = vunpack.c.l.b16 %v1459
  %v1524 = vunpack.c.l.b16 %v1460
  %v1525 = vunpack.c.l.b16 %v1461
  %v1526 = vunpack.c.l.b16 %v1462
  %v1527 = vunpack.c.l.b16 %v1463
  %v1528 = vunpack.c.l.b16 %v1464
  %v1529 = vunpack.c.l.b16 %v1465
  %v1530 = vunpack.c.l.b16 %v1466
  %v1531 = vunpack.c.l.b16 %v1467
  %v1532 = vunpack.c.l.b16 %v1468
  %v1533 = vunpack.c.l.b16 %v1469
  %v1534 = vunpack.c.l.b16 %v1470
  %v1535 = vunpack.c.l.b16 %v1471
  %v1536 = vunpack.c.l.b16 %v1472
  %v1537 = vunpack.c.l.b16 %v1473
  %v1538 = vunpack.c.l.b16 %v1474
  %v1539 = vunpack.c.l.b16 %v1475
  %v1540 = vpack.c.b16 %v1509, %v1508
  %v1541 = vpack.c.b16 %v1511, %v1510
  %v1542 = vpack.c.b16 %v1513, %v1512
  %v1543 = vpack.c.b16 %v1515, %v1514
  %v1544 = vpack.c.b16 %v1517, %v1516
  %v1545 = vpack.c.b16 %v1519, %v1518
  %v1546 = vpack.c.b16 %v1521, %v1520
  %v1547 = vpack.c.b16 %v1523, %v1522
  %v1548 = vpack.c.b16 %v1525, %v1524
  %v1549 = vpack.c.b16 %v1527, %v1526
  %v1550 = vpack.c.b16 %v1529, %v1528
  %v1551 = vpack.c.b16 %v1531, %v1530
  %v1552 = vpack.c.b16 %v1533, %v1532
  %v1553 = vpack.c.b16 %v1535, %v1534
  %v1554 = vpack.c.b16 %v1537, %v1536
  %v1555 = vpack.c.b16 %v1539, %v1538
  %1572 = vmatprep.subr.bf16.mxu0 0
  %1573 = vmatpush1.bf16.msra.mxu0 %v1540
  %1574 = vmatprep.subr.bf16.mxu0 0
  %1575 = vmatpush1.bf16.msra.mxu0 %v1541
  %1576 = vmatprep.subr.bf16.mxu0 0
  %1577 = vmatpush1.bf16.msra.mxu0 %v1542
  %1578 = vmatprep.subr.bf16.mxu0 0
  %1579 = vmatpush1.bf16.msra.mxu0 %v1543
  %1580 = vmatprep.subr.bf16.mxu0 0
  %1581 = vmatpush1.bf16.msra.mxu0 %v1544
  %1582 = vmatprep.subr.bf16.mxu0 0
  %1583 = vmatpush1.bf16.msra.mxu0 %v1545
  %1584 = vmatprep.subr.bf16.mxu0 0
  %1585 = vmatpush1.bf16.msra.mxu0 %v1546
  %1586 = vmatprep.subr.bf16.mxu0 0
  %1587 = vmatpush1.bf16.msra.mxu0 %v1547
  %1588 = vmatprep.subr.bf16.mxu0 0
  %1589 = vmatpush1.bf16.msra.mxu0 %v1548
  %1590 = vmatprep.subr.bf16.mxu0 0
  %1591 = vmatpush1.bf16.msra.mxu0 %v1549
  %1592 = vmatprep.subr.bf16.mxu0 0
  %1593 = vmatpush1.bf16.msra.mxu0 %v1550
  %1594 = vmatprep.subr.bf16.mxu0 0
  %1595 = vmatpush1.bf16.msra.mxu0 %v1551
  %1596 = vmatprep.subr.bf16.mxu0 0
  %1597 = vmatpush1.bf16.msra.mxu0 %v1552
  %1598 = vmatprep.subr.bf16.mxu0 0
  %1599 = vmatpush1.bf16.msra.mxu0 %v1553
  %1600 = vmatprep.subr.bf16.mxu0 0
  %1601 = vmatpush1.bf16.msra.mxu0 %v1554
  %1602 = vmatprep.subr.bf16.mxu0 0
  %1603 = vmatpush1.bf16.msra.mxu0 %v1555
  %1604 = vmatprep.mubr.bf16.mxu0 %v1443
  %1605 = vmatmul.mubr.bf16.gmra.mrb[0].mxu0 %v1442
  %v1606 = vpop.f32.mrb[0].mxu0
  %v1607 = vadd.f32 0.0, %v1606
  %v1608 = vpop.f32.mrb[0].mxu0
  %v1609 = vpop.f32.mrb[0].mxu0
  %v1610 = vpop.f32.mrb[0].mxu0
  %1611 = vdwg.mxu0
  %1612 = vst [vmem:[%s4] sm:$0xff] %v1607
  // Predicated region
  $region18: #{gender_branch.1} parent=0 // pred_check
    _
  $region19: #{gender_branch.1} parent=0 // pred_check_branch
    %1614 = sbr.rel (0) target = $region21
  $region20: #{gender_branch.1} parent=0 // pred_region
    _
  $region21: #{gender_branch.1} parent=0 // pred_fallthru
    _
  // Predicated region
  $region22: #{gender_branch.1} parent=0 // pred_check
    _
  $region23: #{gender_branch.1} parent=0 // pred_check_branch
    %1616 = sbr.rel (0) target = $region25
  $region24: #{gender_branch.1} parent=0 // pred_region
    _
  $region25: #{gender_branch.1} parent=0 // pred_fallthru
    _

</llo_original>
